<compile_context>
chip_gen: v7x
topology: tpu7x:2x2x1
jax: 0.10.0
libtpu: 0.0.40
codegen_flags: <defaults>
</compile_context>

<pallas_src>
import jax
import jax.numpy as jnp
import numpy as np
from jax import lax
from jax.experimental import pallas as pl
from jax.experimental.pallas import tpu as pltpu


def _make_resblock_kernel(H, W):
    """Build the fused ResBlock kernel for a fixed spatial size (H, W)."""
    HW = H * W
    PAD = W + 1  # max |flat offset| of a 3x3 tap in row-major (H*W) indexing

    def kernel(x_ref, w1_ref, b1_ref, w2_ref, b2_ref, colmask_ref, out_ref):
        # x_ref:       (1, C, HW)  f32  one batch element, channel-major
        # w1_ref:      (C, 9*C)    f32  row = out channel, col = (ky*3+kx)*Cin + ci
        # b1_ref:      (C, 1)      f32
        # w2_ref:      (C, 9*C)    f32
        # b2_ref:      (C, 1)      f32
        # colmask_ref: (2, HW)     f32  [0]: 0 where w==0, [1]: 0 where w==W-1
        # out_ref:     (1, C, HW)  f32
        x = x_ref[0]                                    # (C, HW) f32
        mask_l = colmask_ref[0:1, :]                    # (1, HW)
        mask_r = colmask_ref[1:2, :]                    # (1, HW)

        def conv3x3(act, w_ref, b_ref):
            # act: (Cin, HW), already ReLU'd, f32.
            cin = act.shape[0]
            zpad = jnp.zeros((cin, PAD), dtype=act.dtype)
            padded = jnp.concatenate([zpad, act, zpad], axis=1)   # (Cin, HW + 2*PAD)
            taps = []
            for ky in range(3):
                for kx in range(3):
                    off = (ky - 1) * W + (kx - 1)
                    s = padded[:, PAD + off: PAD + off + HW]      # act shifted by `off`
                    if kx == 0:       # left neighbour read is invalid at w == 0
                        s = s * mask_l
                    elif kx == 2:     # right neighbour read is invalid at w == W-1
                        s = s * mask_r
                    taps.append(s)
            patches = jnp.concatenate(taps, axis=0)               # (9*Cin, HW)
            # Single MXU matmul per conv (K = 9*Cin), f32 accumulation, bias folded in.
            return b_ref[...] + jnp.dot(w_ref[...], patches,
                                        preferred_element_type=jnp.float32)

        r = conv3x3(jnp.maximum(x, 0.0), w1_ref, b1_ref)          # conv1(relu(x))
        r = conv3x3(jnp.maximum(r, 0.0), w2_ref, b2_ref)          # conv2(relu(r))
        out_ref[0] = x + r                                        # residual in full f32

    return kernel


def resblock_forward(x_nchw, w1, b1, w2, b2):
    """ResBlock forward.

    x_nchw: (N, C, H, W) f32; w1/w2: (Cout, Cin, 3, 3) OIHW (PyTorch layout);
    b1/b2: (Cout,).  Returns (N, C, H, W) f32.
    """
    N, C, H, W = x_nchw.shape
    Cout, Cin, KH, KW = w1.shape
    assert (KH, KW) == (3, 3) and Cin == C
    assert Cout == C, "downsample-free ResBlock requires indim == outdim"
    assert w2.shape == (Cout, Cout, 3, 3)
    HW = H * W

    # Free layout change: NCHW -> (N, C, H*W); H*W lands on the lane axis.
    x_flat = x_nchw.reshape(N, C, HW).astype(jnp.float32)

    # Weights (Cout, Cin, ky, kx) -> (Cout, (ky*3 + kx)*Cin + ci); tiny, done once.
    w1m = jnp.transpose(w1, (0, 2, 3, 1)).reshape(Cout, 9 * C).astype(jnp.float32)
    w2m = jnp.transpose(w2, (0, 2, 3, 1)).reshape(Cout, 9 * Cout).astype(jnp.float32)
    b1c = b1.reshape(Cout, 1).astype(jnp.float32)
    b2c = b2.reshape(Cout, 1).astype(jnp.float32)

    # Column-boundary validity masks (compile-time constants).
    wcol = np.arange(HW) % W
    colmask = jnp.asarray(
        np.stack([(wcol != 0), (wcol != W - 1)]).astype(np.float32))       # (2, HW)

    out_flat = pl.pallas_call(
        _make_resblock_kernel(H, W),
        out_shape=jax.ShapeDtypeStruct((N, C, HW), jnp.float32),
        grid_spec=pltpu.PrefetchScalarGridSpec(
            num_scalar_prefetch=0,
            grid=(N,),
            in_specs=[
                pl.BlockSpec((1, C, HW), lambda n: (n, 0, 0)),     # x
                pl.BlockSpec((Cout, 9 * C), lambda n: (0, 0)),     # w1 (im2col form)
                pl.BlockSpec((Cout, 1), lambda n: (0, 0)),         # b1
                pl.BlockSpec((Cout, 9 * Cout), lambda n: (0, 0)),  # w2 (im2col form)
                pl.BlockSpec((Cout, 1), lambda n: (0, 0)),         # b2
                pl.BlockSpec((2, HW), lambda n: (0, 0)),           # column masks
            ],
            out_specs=pl.BlockSpec((1, C, HW), lambda n: (n, 0, 0)),
        ),
        compiler_params=pltpu.CompilerParams(
            dimension_semantics=("parallel",),
        ),
    )(x_flat, w1m, b1c, w2m, b2c, colmask)

    return out_flat.reshape(N, C, H, W)


def _reference(x, w1, b1, w2, b2):
    # Pure-JAX f32 reference (PyTorch-equivalent semantics).
    dn = lax.conv_dimension_numbers(x.shape, w1.shape, ("NCHW", "OIHW", "NCHW"))
    r = lax.conv_general_dilated(
        jnp.maximum(x, 0.0), w1, (1, 1), "SAME", dimension_numbers=dn,
        precision=lax.Precision.HIGHEST) + b1[None, :, None, None]
    r = lax.conv_general_dilated(
        jnp.maximum(r, 0.0), w2, (1, 1), "SAME", dimension_numbers=dn,
        precision=lax.Precision.HIGHEST) + b2[None, :, None, None]
    return x + r


if __name__ == "__main__":
    # Small shapes: indim == outdim, stride == 1 -> downsample is None.
    N, C, H, W = 2, 4, 16, 16
    key = jax.random.PRNGKey(0)
    kx, kw1, kb1, kw2, kb2 = jax.random.split(key, 5)

    x = jax.random.normal(kx, (N, C, H, W), dtype=jnp.float32)
    # Deterministic synthetic parameters in PyTorch OIHW layout.
    w1 = 0.1 * jax.random.normal(kw1, (C, C, 3, 3), dtype=jnp.float32)
    b1 = 0.1 * jax.random.normal(kb1, (C,), dtype=jnp.float32)
    w2 = 0.1 * jax.random.normal(kw2, (C, C, 3, 3), dtype=jnp.float32)
    b2 = 0.1 * jax.random.normal(kb2, (C,), dtype=jnp.float32)

    out = jax.block_until_ready(resblock_forward(x, w1, b1, w2, b2))

    ref = _reference(x, w1, b1, w2, b2)
    assert out.shape == (N, C, H, W)
    assert jnp.allclose(out, ref, atol=5e-3, rtol=5e-3), "mismatch vs JAX reference"

    print("KERNEL_OK")
</pallas_src>

<mosaic_0001>
module attributes {stable_mosaic.version = 11 : i64} {
  func.func @kernel(%arg0: i32, %arg1: memref<1x4x256xf32, #tpu.memory_space<vmem>>, %arg2: memref<4x36xf32, #tpu.memory_space<vmem>>, %arg3: memref<4x1xf32, #tpu.memory_space<vmem>>, %arg4: memref<4x36xf32, #tpu.memory_space<vmem>>, %arg5: memref<4x1xf32, #tpu.memory_space<vmem>>, %arg6: memref<2x256xf32, #tpu.memory_space<vmem>>, %arg7: memref<1x4x256xf32, #tpu.memory_space<vmem>>) attributes {dimension_semantics = [#tpu.dimension_semantics<parallel>], iteration_bounds = array<i64: 2>, scalar_prefetch = 0 : i64, scratch_operands = 0 : i64, tpu.core_type = #tpu.core_type<tc>, window_params = [{transform_indices = @transform_0, window_bounds = array<i64: 1, 4, 256>}, {pipeline_mode = #tpu.pipeline_mode<synchronous>, transform_indices = @transform_1, window_bounds = array<i64: 4, 36>}, {pipeline_mode = #tpu.pipeline_mode<synchronous>, transform_indices = @transform_2, window_bounds = array<i64: 4, 1>}, {pipeline_mode = #tpu.pipeline_mode<synchronous>, transform_indices = @transform_3, window_bounds = array<i64: 4, 36>}, {pipeline_mode = #tpu.pipeline_mode<synchronous>, transform_indices = @transform_4, window_bounds = array<i64: 4, 1>}, {pipeline_mode = #tpu.pipeline_mode<synchronous>, transform_indices = @transform_5, window_bounds = array<i64: 2, 256>}, {transform_indices = @transform_6, window_bounds = array<i64: 1, 4, 256>}]} {
    %c0 = arith.constant 0 : index
    %c0_0 = arith.constant 0 : index
    %c0_1 = arith.constant 0 : index
    %0 = vector.load %arg1[%c0, %c0_0, %c0_1] : memref<1x4x256xf32, #tpu.memory_space<vmem>>, vector<1x4x256xf32>
    %1 = vector.shape_cast %0 : vector<1x4x256xf32> to vector<4x256xf32>
    %c0_2 = arith.constant 0 : index
    %c0_3 = arith.constant 0 : index
    %2 = vector.load %arg6[%c0_2, %c0_3] : memref<2x256xf32, #tpu.memory_space<vmem>>, vector<1x256xf32>
    %c1 = arith.constant 1 : index
    %c0_4 = arith.constant 0 : index
    %3 = vector.load %arg6[%c1, %c0_4] : memref<2x256xf32, #tpu.memory_space<vmem>>, vector<1x256xf32>
    %cst = arith.constant 0.000000e+00 : f32
    %4 = vector.broadcast %cst : f32 to vector<4x256xf32>
    %5 = arith.maximumf %1, %4 : vector<4x256xf32>
    %cst_5 = arith.constant 0.000000e+00 : f32
    %6 = vector.broadcast %cst_5 : f32 to vector<4x17xf32>
    %7 = tpu.concatenate %6, %5, %6 in 1 : vector<4x17xf32>, vector<4x256xf32>, vector<4x17xf32> -> vector<4x290xf32>
    %8 = vector.extract_strided_slice %7 {offsets = [0, 0], sizes = [4, 256], strides = [1, 1]} : vector<4x290xf32> to vector<4x256xf32>
    %9 = vector.broadcast %2 : vector<1x256xf32> to vector<4x256xf32>
    %10 = arith.mulf %8, %9 : vector<4x256xf32>
    %11 = vector.extract_strided_slice %7 {offsets = [0, 1], sizes = [4, 256], strides = [1, 1]} : vector<4x290xf32> to vector<4x256xf32>
    %12 = vector.extract_strided_slice %7 {offsets = [0, 2], sizes = [4, 256], strides = [1, 1]} : vector<4x290xf32> to vector<4x256xf32>
    %13 = vector.broadcast %3 : vector<1x256xf32> to vector<4x256xf32>
    %14 = arith.mulf %12, %13 : vector<4x256xf32>
    %15 = vector.extract_strided_slice %7 {offsets = [0, 16], sizes = [4, 256], strides = [1, 1]} : vector<4x290xf32> to vector<4x256xf32>
    %16 = vector.broadcast %2 : vector<1x256xf32> to vector<4x256xf32>
    %17 = arith.mulf %15, %16 : vector<4x256xf32>
    %18 = vector.extract_strided_slice %7 {offsets = [0, 17], sizes = [4, 256], strides = [1, 1]} : vector<4x290xf32> to vector<4x256xf32>
    %19 = vector.extract_strided_slice %7 {offsets = [0, 18], sizes = [4, 256], strides = [1, 1]} : vector<4x290xf32> to vector<4x256xf32>
    %20 = vector.broadcast %3 : vector<1x256xf32> to vector<4x256xf32>
    %21 = arith.mulf %19, %20 : vector<4x256xf32>
    %22 = vector.extract_strided_slice %7 {offsets = [0, 32], sizes = [4, 256], strides = [1, 1]} : vector<4x290xf32> to vector<4x256xf32>
    %23 = vector.broadcast %2 : vector<1x256xf32> to vector<4x256xf32>
    %24 = arith.mulf %22, %23 : vector<4x256xf32>
    %25 = vector.extract_strided_slice %7 {offsets = [0, 33], sizes = [4, 256], strides = [1, 1]} : vector<4x290xf32> to vector<4x256xf32>
    %26 = vector.extract_strided_slice %7 {offsets = [0, 34], sizes = [4, 256], strides = [1, 1]} : vector<4x290xf32> to vector<4x256xf32>
    %27 = vector.broadcast %3 : vector<1x256xf32> to vector<4x256xf32>
    %28 = arith.mulf %26, %27 : vector<4x256xf32>
    %29 = tpu.concatenate %10, %11, %14, %17, %18, %21, %24, %25, %28 in 0 : vector<4x256xf32>, vector<4x256xf32>, vector<4x256xf32>, vector<4x256xf32>, vector<4x256xf32>, vector<4x256xf32>, vector<4x256xf32>, vector<4x256xf32>, vector<4x256xf32> -> vector<36x256xf32>
    %c0_6 = arith.constant 0 : index
    %c0_7 = arith.constant 0 : index
    %30 = vector.load %arg3[%c0_6, %c0_7] : memref<4x1xf32, #tpu.memory_space<vmem>>, vector<4x1xf32>
    %c0_8 = arith.constant 0 : index
    %c0_9 = arith.constant 0 : index
    %31 = vector.load %arg2[%c0_8, %c0_9] : memref<4x36xf32, #tpu.memory_space<vmem>>, vector<4x36xf32>
    %cst_10 = arith.constant dense<0.000000e+00> : vector<4x256xf32>
    %32 = tpu.matmul %31, %29, %cst_10 {dimension_numbers = #tpu.dot_dimension_numbers<[1], [0], [0], [1], [0, 0, 1, 1], [], []>} : vector<4x36xf32>, vector<36x256xf32>, vector<4x256xf32> -> vector<4x256xf32>
    %33 = vector.broadcast %30 : vector<4x1xf32> to vector<4x256xf32>
    %34 = arith.addf %33, %32 : vector<4x256xf32>
    %cst_11 = arith.constant 0.000000e+00 : f32
    %35 = vector.broadcast %cst_11 : f32 to vector<4x256xf32>
    %36 = arith.maximumf %34, %35 : vector<4x256xf32>
    %cst_12 = arith.constant 0.000000e+00 : f32
    %37 = vector.broadcast %cst_12 : f32 to vector<4x17xf32>
    %38 = tpu.concatenate %37, %36, %37 in 1 : vector<4x17xf32>, vector<4x256xf32>, vector<4x17xf32> -> vector<4x290xf32>
    %39 = vector.extract_strided_slice %38 {offsets = [0, 0], sizes = [4, 256], strides = [1, 1]} : vector<4x290xf32> to vector<4x256xf32>
    %40 = vector.broadcast %2 : vector<1x256xf32> to vector<4x256xf32>
    %41 = arith.mulf %39, %40 : vector<4x256xf32>
    %42 = vector.extract_strided_slice %38 {offsets = [0, 1], sizes = [4, 256], strides = [1, 1]} : vector<4x290xf32> to vector<4x256xf32>
    %43 = vector.extract_strided_slice %38 {offsets = [0, 2], sizes = [4, 256], strides = [1, 1]} : vector<4x290xf32> to vector<4x256xf32>
    %44 = vector.broadcast %3 : vector<1x256xf32> to vector<4x256xf32>
    %45 = arith.mulf %43, %44 : vector<4x256xf32>
    %46 = vector.extract_strided_slice %38 {offsets = [0, 16], sizes = [4, 256], strides = [1, 1]} : vector<4x290xf32> to vector<4x256xf32>
    %47 = vector.broadcast %2 : vector<1x256xf32> to vector<4x256xf32>
    %48 = arith.mulf %46, %47 : vector<4x256xf32>
    %49 = vector.extract_strided_slice %38 {offsets = [0, 17], sizes = [4, 256], strides = [1, 1]} : vector<4x290xf32> to vector<4x256xf32>
    %50 = vector.extract_strided_slice %38 {offsets = [0, 18], sizes = [4, 256], strides = [1, 1]} : vector<4x290xf32> to vector<4x256xf32>
    %51 = vector.broadcast %3 : vector<1x256xf32> to vector<4x256xf32>
    %52 = arith.mulf %50, %51 : vector<4x256xf32>
    %53 = vector.extract_strided_slice %38 {offsets = [0, 32], sizes = [4, 256], strides = [1, 1]} : vector<4x290xf32> to vector<4x256xf32>
    %54 = vector.broadcast %2 : vector<1x256xf32> to vector<4x256xf32>
    %55 = arith.mulf %53, %54 : vector<4x256xf32>
    %56 = vector.extract_strided_slice %38 {offsets = [0, 33], sizes = [4, 256], strides = [1, 1]} : vector<4x290xf32> to vector<4x256xf32>
    %57 = vector.extract_strided_slice %38 {offsets = [0, 34], sizes = [4, 256], strides = [1, 1]} : vector<4x290xf32> to vector<4x256xf32>
    %58 = vector.broadcast %3 : vector<1x256xf32> to vector<4x256xf32>
    %59 = arith.mulf %57, %58 : vector<4x256xf32>
    %60 = tpu.concatenate %41, %42, %45, %48, %49, %52, %55, %56, %59 in 0 : vector<4x256xf32>, vector<4x256xf32>, vector<4x256xf32>, vector<4x256xf32>, vector<4x256xf32>, vector<4x256xf32>, vector<4x256xf32>, vector<4x256xf32>, vector<4x256xf32> -> vector<36x256xf32>
    %c0_13 = arith.constant 0 : index
    %c0_14 = arith.constant 0 : index
    %61 = vector.load %arg5[%c0_13, %c0_14] : memref<4x1xf32, #tpu.memory_space<vmem>>, vector<4x1xf32>
    %c0_15 = arith.constant 0 : index
    %c0_16 = arith.constant 0 : index
    %62 = vector.load %arg4[%c0_15, %c0_16] : memref<4x36xf32, #tpu.memory_space<vmem>>, vector<4x36xf32>
    %cst_17 = arith.constant dense<0.000000e+00> : vector<4x256xf32>
    %63 = tpu.matmul %62, %60, %cst_17 {dimension_numbers = #tpu.dot_dimension_numbers<[1], [0], [0], [1], [0, 0, 1, 1], [], []>} : vector<4x36xf32>, vector<36x256xf32>, vector<4x256xf32> -> vector<4x256xf32>
    %64 = vector.broadcast %61 : vector<4x1xf32> to vector<4x256xf32>
    %65 = arith.addf %64, %63 : vector<4x256xf32>
    %66 = arith.addf %1, %65 : vector<4x256xf32>
    %c0_18 = arith.constant 0 : index
    %c0_19 = arith.constant 0 : index
    %c0_20 = arith.constant 0 : index
    %67 = vector.load %arg7[%c0_18, %c0_19, %c0_20] : memref<1x4x256xf32, #tpu.memory_space<vmem>>, vector<1x4x256xf32>
    %68 = vector.shape_cast %67 : vector<1x4x256xf32> to vector<4x256xf32>
    %69 = vector.shape_cast %66 : vector<4x256xf32> to vector<1x4x256xf32>
    tpu.vector_store %arg7[%c0_18, %c0_19, %c0_20], %69 {strides = array<i32>} : memref<1x4x256xf32, #tpu.memory_space<vmem>>, vector<1x4x256xf32>,
    return
  }
  func.func @transform_0(%arg0: i32) -> (i32, i32, i32) {
    %c0_i32 = arith.constant 0 : i32
    %c0_i32_0 = arith.constant 0 : i32
    %c0_i32_1 = arith.constant 0 : i32
    return %arg0, %c0_i32, %c0_i32_0 : i32, i32, i32
  }
  func.func @transform_1(%arg0: i32) -> (i32, i32) {
    %c0_i32 = arith.constant 0 : i32
    %c0_i32_0 = arith.constant 0 : i32
    %c0_i32_1 = arith.constant 0 : i32
    return %c0_i32, %c0_i32_0 : i32, i32
  }
  func.func @transform_2(%arg0: i32) -> (i32, i32) {
    %c0_i32 = arith.constant 0 : i32
    %c0_i32_0 = arith.constant 0 : i32
    %c0_i32_1 = arith.constant 0 : i32
    return %c0_i32, %c0_i32_0 : i32, i32
  }
  func.func @transform_3(%arg0: i32) -> (i32, i32) {
    %c0_i32 = arith.constant 0 : i32
    %c0_i32_0 = arith.constant 0 : i32
    %c0_i32_1 = arith.constant 0 : i32
    return %c0_i32, %c0_i32_0 : i32, i32
  }
  func.func @transform_4(%arg0: i32) -> (i32, i32) {
    %c0_i32 = arith.constant 0 : i32
    %c0_i32_0 = arith.constant 0 : i32
    %c0_i32_1 = arith.constant 0 : i32
    return %c0_i32, %c0_i32_0 : i32, i32
  }
  func.func @transform_5(%arg0: i32) -> (i32, i32) {
    %c0_i32 = arith.constant 0 : i32
    %c0_i32_0 = arith.constant 0 : i32
    %c0_i32_1 = arith.constant 0 : i32
    return %c0_i32, %c0_i32_0 : i32, i32
  }
  func.func @transform_6(%arg0: i32) -> (i32, i32, i32) {
    %c0_i32 = arith.constant 0 : i32
    %c0_i32_0 = arith.constant 0 : i32
    %c0_i32_1 = arith.constant 0 : i32
    return %arg0, %c0_i32, %c0_i32_0 : i32, i32, i32
  }
}

</mosaic_0001>

<llo_original>
// kernel: tpu_custom_call.1
$region0: #{tpu_custom_call.1}
  #allocation0 [shape = 'u32[]', space=smem, size = 0x4, offset = 0x4, fixed_abs, tag = 'smem constant byte address 0x4 - core index']
  #allocation1 [shape = 'u32[144,128]{1,0:T(1,128)}', space=vmem, size = 0x12000, scoped, tag = 'internal scratch']
  %s0 = inlined_call_operand.hbm [shape: f32[2,4,256], index: 0, kind: input, shape index: {}]
  %s1 = inlined_call_operand.vmem [shape: f32[4,36], index: 1, kind: input, shape index: {}]
  %s2 = inlined_call_operand.vmem [shape: f32[4,1], index: 2, kind: input, shape index: {}]
  %s3 = inlined_call_operand.vmem [shape: f32[4,36], index: 3, kind: input, shape index: {}]
  %s4 = inlined_call_operand.vmem [shape: f32[4,1], index: 4, kind: input, shape index: {}]
  %s5 = inlined_call_operand.vmem [shape: f32[2,256], index: 5, kind: input, shape index: {}]
  %s6 = inlined_call_operand.hbm [shape: f32[2,4,256], index: 6, kind: output, shape index: {}]
  %s7 = sld [smem:[#allocation0]]
  $region61: #{tpu_custom_call.1} parent=0
    _
  %s9 = ssub.s32 1, %s7
  %s10 = scalar_select 0, %s9, %s7
  $region1: #{tpu_custom_call.1} parent=0
    #allocation2 [shape = 'u8[8192]{0}', space=vmem, size = 0x2000, scoped, tag = 'input window, operand 0']
    #allocation3 [shape = 's32[2]{0}', space=sflag, size = 0x8, scoped, tag = 'scoped memory for tpu_custom_call.1']
    #allocation4 [shape = 's32[2]{0}', space=sflag, size = 0x8, scoped, tag = 'scoped memory for tpu_custom_call.1']
    #allocation5 [shape = 'u8[8192]{0}', space=vmem, size = 0x2000, scoped, tag = 'output window, operand 0']
    %11 = vsyncpa [#allocation3], 0
    %s12 = scalar_lea.sflag [#allocation3], 1
    %13 = vsyncpa %s12, 0
    %14 = vsyncpa [#allocation4], 0
    %s15 = scalar_lea.sflag [#allocation4], 1
    %16 = vsyncpa %s15, 0
    loop: start=0, step=1, limit=4
    $region2: #{tpu_custom_call.1} parent=1 // loop_pre_header
      _
    $region3: #{tpu_custom_call.1} parent=1 // loop_header
      %s18 = sphi 0, %s22
      %p19 = scmp.ge.s32.totalorder %s18, 4
      %s28 = sphi 0, %s30
      %s31 = sphi 0, %s28
      %s32 = sphi 0, %s31
      %s48 = sphi 0, %s32
      %s52 = sphi 0, %s52
      %s54 = sphi 0, %s52
      %s55 = sphi 0, %s54
      %s69 = sphi 0, %s55
      %s73 = sphi 0, %s73
      %s75 = sphi 0, %s73
      %s76 = sphi 0, %s75
      %s90 = sphi 0, %s76
      %s94 = sphi 0, %s94
      %s96 = sphi 0, %s94
      %s97 = sphi 0, %s96
      %s111 = sphi 0, %s97
      %s115 = sphi 0, %s115
      %s117 = sphi 0, %s115
      %s118 = sphi 0, %s117
      %s132 = sphi 0, %s118
      %s136 = sphi 0, %s136
      %s138 = sphi 0, %s136
      %s139 = sphi 0, %s138
      %s153 = sphi 0, %s139
      %s159 = sphi 0, %s161
      %s162 = sphi 0, %s159
      %s163 = sphi 0, %s162
      %s179 = sphi 0, %s163
    $region4: #{tpu_custom_call.1} parent=1 // loop_header_branch
      %21 = sbr.rel (%p19) target = $region8
    $region5: #{tpu_custom_call.1} parent=1 // loop_body
      %s23 = ssub.s32 %s18, 1
      %s24 = ssub.s32 %s18, 2
      %s25 = sadd.s32 %s18, 1
      %s26 = ssub.s32 %s18, %s25
      %p27 = scmp.eq.s32.totalorder %s26, 0
      %s29 = sadd.s32 %s28, 1
      %s30 = scalar_select %p27, %s28, %s29
      %p33 = pneg %p27
      %p34 = scmp.eq.s32.totalorder %s18, 1
      %p35 = por %p33, %p34
      %p36 = scmp.ne.s32.totalorder %s28, %s31
      %p37 = scmp.eq.s32.totalorder %s18, 0
      %p38 = por %p36, %p37
      %p39 = scmp.ne.s32.totalorder %s28, %s31
      %p40 = scmp.eq.s32.totalorder %s23, 1
      %p41 = por %p39, %p40
      %p42 = scmp.ne.s32.totalorder %s31, %s32
      %p43 = scmp.eq.s32.totalorder %s23, 0
      %p44 = por %p42, %p43
      %p45 = scmp.ne.s32.totalorder %s31, %s32
      %p46 = scmp.eq.s32.totalorder %s24, 1
      %p47 = por %p45, %p46
      %p49 = scmp.ne.s32.totalorder %s32, %s48
      %p50 = scmp.eq.s32.totalorder %s24, 0
      %p51 = por %p49, %p50
      %s53 = sadd.s32 %s52, 1
      %p56 = scmp.eq.s32.totalorder %s18, 1
      %p57 = scmp.ne.s32.totalorder %s52, %s54
      %p58 = scmp.eq.s32.totalorder %s18, 0
      %p59 = por %p57, %p58
      %p60 = scmp.ne.s32.totalorder %s52, %s54
      %p61 = scmp.eq.s32.totalorder %s23, 1
      %p62 = por %p60, %p61
      %p63 = scmp.ne.s32.totalorder %s54, %s55
      %p64 = scmp.eq.s32.totalorder %s23, 0
      %p65 = por %p63, %p64
      %p66 = scmp.ne.s32.totalorder %s54, %s55
      %p67 = scmp.eq.s32.totalorder %s24, 1
      %p68 = por %p66, %p67
      %p70 = scmp.ne.s32.totalorder %s55, %s69
      %p71 = scmp.eq.s32.totalorder %s24, 0
      %p72 = por %p70, %p71
      %s74 = sadd.s32 %s73, 1
      %p77 = scmp.eq.s32.totalorder %s18, 1
      %p78 = scmp.ne.s32.totalorder %s73, %s75
      %p79 = scmp.eq.s32.totalorder %s18, 0
      %p80 = por %p78, %p79
      %p81 = scmp.ne.s32.totalorder %s73, %s75
      %p82 = scmp.eq.s32.totalorder %s23, 1
      %p83 = por %p81, %p82
      %p84 = scmp.ne.s32.totalorder %s75, %s76
      %p85 = scmp.eq.s32.totalorder %s23, 0
      %p86 = por %p84, %p85
      %p87 = scmp.ne.s32.totalorder %s75, %s76
      %p88 = scmp.eq.s32.totalorder %s24, 1
      %p89 = por %p87, %p88
      %p91 = scmp.ne.s32.totalorder %s76, %s90
      %p92 = scmp.eq.s32.totalorder %s24, 0
      %p93 = por %p91, %p92
      %s95 = sadd.s32 %s94, 1
      %p98 = scmp.eq.s32.totalorder %s18, 1
      %p99 = scmp.ne.s32.totalorder %s94, %s96
      %p100 = scmp.eq.s32.totalorder %s18, 0
      %p101 = por %p99, %p100
      %p102 = scmp.ne.s32.totalorder %s94, %s96
      %p103 = scmp.eq.s32.totalorder %s23, 1
      %p104 = por %p102, %p103
      %p105 = scmp.ne.s32.totalorder %s96, %s97
      %p106 = scmp.eq.s32.totalorder %s23, 0
      %p107 = por %p105, %p106
      %p108 = scmp.ne.s32.totalorder %s96, %s97
      %p109 = scmp.eq.s32.totalorder %s24, 1
      %p110 = por %p108, %p109
      %p112 = scmp.ne.s32.totalorder %s97, %s111
      %p113 = scmp.eq.s32.totalorder %s24, 0
      %p114 = por %p112, %p113
      %s116 = sadd.s32 %s115, 1
      %p119 = scmp.eq.s32.totalorder %s18, 1
      %p120 = scmp.ne.s32.totalorder %s115, %s117
      %p121 = scmp.eq.s32.totalorder %s18, 0
      %p122 = por %p120, %p121
      %p123 = scmp.ne.s32.totalorder %s115, %s117
      %p124 = scmp.eq.s32.totalorder %s23, 1
      %p125 = por %p123, %p124
      %p126 = scmp.ne.s32.totalorder %s117, %s118
      %p127 = scmp.eq.s32.totalorder %s23, 0
      %p128 = por %p126, %p127
      %p129 = scmp.ne.s32.totalorder %s117, %s118
      %p130 = scmp.eq.s32.totalorder %s24, 1
      %p131 = por %p129, %p130
      %p133 = scmp.ne.s32.totalorder %s118, %s132
      %p134 = scmp.eq.s32.totalorder %s24, 0
      %p135 = por %p133, %p134
      %s137 = sadd.s32 %s136, 1
      %p140 = scmp.eq.s32.totalorder %s18, 1
      %p141 = scmp.ne.s32.totalorder %s136, %s138
      %p142 = scmp.eq.s32.totalorder %s18, 0
      %p143 = por %p141, %p142
      %p144 = scmp.ne.s32.totalorder %s136, %s138
      %p145 = scmp.eq.s32.totalorder %s23, 1
      %p146 = por %p144, %p145
      %p147 = scmp.ne.s32.totalorder %s138, %s139
      %p148 = scmp.eq.s32.totalorder %s23, 0
      %p149 = por %p147, %p148
      %p150 = scmp.ne.s32.totalorder %s138, %s139
      %p151 = scmp.eq.s32.totalorder %s24, 1
      %p152 = por %p150, %p151
      %p154 = scmp.ne.s32.totalorder %s139, %s153
      %p155 = scmp.eq.s32.totalorder %s24, 0
      %p156 = por %p154, %p155
      %s157 = ssub.s32 %s18, %s25
      %p158 = scmp.eq.s32.totalorder %s157, 0
      %s160 = sadd.s32 %s159, 1
      %s161 = scalar_select %p158, %s159, %s160
      %p164 = pneg %p158
      %p165 = scmp.eq.s32.totalorder %s18, 1
      %p166 = por %p164, %p165
      %p167 = scmp.ne.s32.totalorder %s159, %s162
      %p168 = scmp.eq.s32.totalorder %s18, 0
      %p169 = por %p167, %p168
      %p170 = scmp.ne.s32.totalorder %s159, %s162
      %p171 = scmp.eq.s32.totalorder %s23, 1
      %p172 = por %p170, %p171
      %p173 = scmp.ne.s32.totalorder %s162, %s163
      %p174 = scmp.eq.s32.totalorder %s23, 0
      %p175 = por %p173, %p174
      %p176 = scmp.ne.s32.totalorder %s162, %s163
      %p177 = scmp.eq.s32.totalorder %s24, 1
      %p178 = por %p176, %p177
      %p180 = scmp.ne.s32.totalorder %s163, %s179
      %p181 = scmp.eq.s32.totalorder %s24, 0
      %p182 = por %p180, %p181
      %p183 = scmp.le.s32.totalorder 1, %s18
      %p184 = scmp.lt.s32.totalorder %s18, 3
      %p185 = pnand %p183, %p184
      %p186 = pneg %p185
      // Predicated region
      $region9: #{tpu_custom_call.1} parent=5 // pred_check
        _
      $region10: #{tpu_custom_call.1} parent=5 // pred_check_branch
        %188 = sbr.rel (%p185) target = $region12
      $region11: #{tpu_custom_call.1} parent=5 // pred_region
        %s189 = ssub.s32 %s18, 1
        // Predicated region
        $region13: #{tpu_custom_call.1} parent=11 // pred_check
          %p190 = pneg %p65
        $region14: #{tpu_custom_call.1} parent=11 // pred_check_branch
          %192 = sbr.rel (%p190) target = $region16
        $region15: #{tpu_custom_call.1} parent=11 // pred_region
          _
        $region16: #{tpu_custom_call.1} parent=11 // pred_fallthru
          _
        // Predicated region
        $region17: #{tpu_custom_call.1} parent=11 // pred_check
          %p193 = pneg %p86
        $region18: #{tpu_custom_call.1} parent=11 // pred_check_branch
          %195 = sbr.rel (%p193) target = $region20
        $region19: #{tpu_custom_call.1} parent=11 // pred_region
          _
        $region20: #{tpu_custom_call.1} parent=11 // pred_fallthru
          _
        // Predicated region
        $region21: #{tpu_custom_call.1} parent=11 // pred_check
          %p196 = pneg %p107
        $region22: #{tpu_custom_call.1} parent=11 // pred_check_branch
          %198 = sbr.rel (%p196) target = $region24
        $region23: #{tpu_custom_call.1} parent=11 // pred_region
          _
        $region24: #{tpu_custom_call.1} parent=11 // pred_fallthru
          _
        // Predicated region
        $region25: #{tpu_custom_call.1} parent=11 // pred_check
          %p199 = pneg %p128
        $region26: #{tpu_custom_call.1} parent=11 // pred_check_branch
          %201 = sbr.rel (%p199) target = $region28
        $region27: #{tpu_custom_call.1} parent=11 // pred_region
          _
        $region28: #{tpu_custom_call.1} parent=11 // pred_fallthru
          _
        // Predicated region
        $region29: #{tpu_custom_call.1} parent=11 // pred_check
          %p202 = pneg %p149
        $region30: #{tpu_custom_call.1} parent=11 // pred_check_branch
          %204 = sbr.rel (%p202) target = $region32
        $region31: #{tpu_custom_call.1} parent=11 // pred_region
          _
        $region32: #{tpu_custom_call.1} parent=11 // pred_fallthru
          _
      $region12: #{tpu_custom_call.1} parent=5 // pred_fallthru
        _
      %p205 = scmp.lt.s32.totalorder %s18, 2
      // Predicated region
      $region33: #{tpu_custom_call.1} parent=5 // pred_check
        %p206 = pneg %p205
      $region34: #{tpu_custom_call.1} parent=5 // pred_check_branch
        %208 = sbr.rel (%p206) target = $region36
      $region35: #{tpu_custom_call.1} parent=5 // pred_region
        // Predicated region
        $region37: #{tpu_custom_call.1} parent=35 // pred_check
          %p209 = pneg %p38
        $region38: #{tpu_custom_call.1} parent=35 // pred_check_branch
          %211 = sbr.rel (%p209) target = $region40
        $region39: #{tpu_custom_call.1} parent=35 // pred_region
          %s212 = sand.u32 %s28, 1
          %s213 = scalar_lea.sflag [#allocation3], %s212
          %s214 = sand.u32 %s28, 1
          %s215 = smul.addr %s214, 8
          %s216 = scalar_lea.vmem [#allocation2], %s215
          %s218 = ssub.s32 128, 128
          %219 = vsyncadd %s213, %s218
          %s220 = smul.addr %s18, 2
          %s221 = smul.addr %s220, 64
          %s222 = scalar_lea.hbm %s0, %s221
          %s224 = sshll.u32 %s216, 4
          %s225 = int_to_ptr.vmem [resolvable:$true] %s224
          %227 = dma.hbm_to_vmem [thread:$0]  %s222, 128, %s225, %s213
        $region40: #{tpu_custom_call.1} parent=35 // pred_fallthru
          _
      $region36: #{tpu_custom_call.1} parent=5 // pred_fallthru
        _
      %p228 = scmp.le.s32.totalorder 1, %s18
      %p229 = scmp.lt.s32.totalorder %s18, 3
      %p230 = pnand %p228, %p229
      %p231 = pneg %p230
      // Predicated region
      $region41: #{tpu_custom_call.1} parent=5 // pred_check
        _
      $region42: #{tpu_custom_call.1} parent=5 // pred_check_branch
        %233 = sbr.rel (%p230) target = $region44
      $region43: #{tpu_custom_call.1} parent=5 // pred_region
        %s234 = ssub.s32 %s18, 1
        %s235 = sand.u32 %s31, 1
        %s236 = scalar_lea.sflag [#allocation3], %s235
        %s237 = sand.u32 %s31, 1
        %s238 = smul.addr %s237, 8
        %s239 = scalar_lea.vmem [#allocation2], %s238
        // Predicated region
        $region45: #{tpu_custom_call.1} parent=43 // pred_check
          %p240 = pneg %p44
        $region46: #{tpu_custom_call.1} parent=43 // pred_check_branch
          %242 = sbr.rel (%p240) target = $region48
        $region47: #{tpu_custom_call.1} parent=43 // pred_region
          %243 = dma.done %s236, 128
        $region48: #{tpu_custom_call.1} parent=43 // pred_fallthru
          _
        %s244 = sand.u32 %s31, 1
        %s245 = scalar_lea.sflag [#allocation3], %s244
        %s246 = sand.u32 %s31, 1
        %s247 = smul.addr %s246, 8
        %s248 = scalar_lea.vmem [#allocation2], %s247
        %p249 = pneg %p44
        %p250 = pneg %p41
        %p251 = pneg %p65
        %p252 = pneg %p62
        %p253 = pneg %p86
        %p254 = pneg %p83
        %p255 = pneg %p107
        %p256 = pneg %p104
        %p257 = pneg %p128
        %p258 = pneg %p125
        %p259 = pneg %p149
        %p260 = pneg %p146
        %p261 = pneg %p175
        %p262 = pneg %p172
        %s263 = sand.u32 %s162, 1
        %s264 = scalar_lea.sflag [#allocation4], %s263
        %s265 = sand.u32 %s162, 1
        %s266 = smul.addr %s265, 8
        %s267 = scalar_lea.vmem [#allocation5], %s266
        %v268 = vld [vmem:[%s239] sm:$0xff]
        %v269 = vld [vmem:[%s5] ss:$2 sm:$0x3]
        %s270 = scalar_lea.vmem %s5, 1
        %v271 = vld [vmem:[%s270] ss:$2 sm:$0x3]
        %v272 = vmax.f32 %v268, 0.0
        %v274 = vcombine.high %v272, %v272
        %275 = vrot.lane.b32.xlu0 %v272, 17
        %v276 = vpop.permute.xlu0 %275
        %277 = vrot.lane.b32.xlu0 %v274, 17
        %v278 = vpop.permute.xlu0 %277
        %vm279 = vcmask 138240
        %v280 = vsel %vm279, %v276, %v278
        %v284 = vsel %vm279, 0.0, %v276
        %v285 = vsel %vm279, %v278, 0.0
        %v287 = vlaneseq
        %v288 = vshrl.u32 %v287, 7
        %v289 = vsub.s32 0, %v288
        %v290 = vrot.slane %v269, %v289
        %v291 = vlaneseq
        %v292 = vshrl.u32 %v291, 7
        %v293 = vsub.s32 1, %v292
        %v294 = vrot.slane %v269, %v293
        %v297 = vmul.f32 %v284, %v290
        %v298 = vmul.f32 %v280, %v294
        %v300 = vlaneseq
        %v301 = vshrl.u32 %v300, 7
        %v302 = vsub.s32 0, %v301
        %v303 = vrot.slane %v271, %v302
        %v304 = vlaneseq
        %v305 = vshrl.u32 %v304, 7
        %v306 = vsub.s32 1, %v305
        %v307 = vrot.slane %v271, %v306
        %308 = vrot.lane.b32.xlu0 %v303, 2
        %v309 = vpop.permute.xlu0 %308
        %310 = vrot.lane.b32.xlu0 %v307, 2
        %v311 = vpop.permute.xlu0 %310
        %vm312 = vcmask 15360
        %v313 = vsel %vm312, %v309, %v311
        %v317 = vmul.f32 %v284, %v309
        %v318 = vmul.f32 %v280, %v313
        %v319 = vmul.f32 %v285, %v311
        %320 = vrot.lane.b32.xlu0 %v290, 16
        %v321 = vpop.permute.xlu0 %320
        %322 = vrot.lane.b32.xlu0 %v294, 16
        %v323 = vpop.permute.xlu0 %322
        %vm324 = vcmask 130048
        %v325 = vsel %vm324, %v321, %v323
        %v329 = vmul.f32 %v284, %v321
        %v330 = vmul.f32 %v280, %v325
        %v331 = vmul.f32 %v285, %v323
        %332 = vrot.lane.b32.xlu0 %v303, 18
        %v333 = vpop.permute.xlu0 %332
        %334 = vrot.lane.b32.xlu0 %v307, 18
        %v335 = vpop.permute.xlu0 %334
        %vm336 = vcmask 146432
        %v337 = vsel %vm336, %v333, %v335
        %v341 = vmul.f32 %v284, %v333
        %v342 = vmul.f32 %v280, %v337
        %v343 = vmul.f32 %v285, %v335
        %344 = vrot.lane.b32.xlu0 %v290, 32
        %v345 = vpop.permute.xlu0 %344
        %346 = vrot.lane.b32.xlu0 %v294, 32
        %v347 = vpop.permute.xlu0 %346
        %vm348 = vcmask 261120
        %v349 = vsel %vm348, %v345, %v347
        %v353 = vmul.f32 %v284, %v345
        %v354 = vmul.f32 %v280, %v349
        %v355 = vmul.f32 %v285, %v347
        %356 = vrot.lane.b32.xlu0 %v303, 34
        %v357 = vpop.permute.xlu0 %356
        %358 = vrot.lane.b32.xlu0 %v307, 34
        %v359 = vpop.permute.xlu0 %358
        %vm360 = vcmask 277504
        %v361 = vsel %vm360, %v357, %v359
        %v365 = vmul.f32 %v284, %v357
        %v366 = vmul.f32 %v280, %v361
        %v367 = vmul.f32 %v285, %v359
        %v370 = vrot.slane %v284, 4
        %v371 = vrot.slane %v280, 4
        %v372 = vrot.slane %v285, 4
        %373 = vrot.lane.b32.xlu0 %v370, 127
        %v374 = vpop.permute.xlu0 %373
        %375 = vrot.lane.b32.xlu0 %v371, 127
        %v376 = vpop.permute.xlu0 %375
        %377 = vrot.lane.b32.xlu0 %v372, 127
        %v378 = vpop.permute.xlu0 %377
        %vm379 = vcmask 1039360
        %v380 = vsel %vm379, %v374, %v376
        %v381 = vsel %vm379, %v376, %v378
        %387 = vrot.lane.b32.xlu0 %v317, 126
        %v388 = vpop.permute.xlu0 %387
        %389 = vrot.lane.b32.xlu0 %v318, 126
        %v390 = vpop.permute.xlu0 %389
        %391 = vrot.lane.b32.xlu0 %v319, 126
        %v392 = vpop.permute.xlu0 %391
        %vm393 = vcmask 1031168
        %v394 = vsel %vm393, %v388, %v390
        %v395 = vsel %vm393, %v390, %v392
        %v401 = vrot.slane %v329, 4
        %v402 = vrot.slane %v330, 4
        %v403 = vrot.slane %v331, 4
        %404 = vrot.lane.b32.xlu0 %v401, 112
        %v405 = vpop.permute.xlu0 %404
        %406 = vrot.lane.b32.xlu0 %v402, 112
        %v407 = vpop.permute.xlu0 %406
        %408 = vrot.lane.b32.xlu0 %v403, 112
        %v409 = vpop.permute.xlu0 %408
        %vm410 = vcmask 916480
        %v411 = vsel %vm410, %v405, %v407
        %v412 = vsel %vm410, %v407, %v409
        %415 = vrot.lane.b32.xlu0 %v284, 111
        %v416 = vpop.permute.xlu0 %415
        %417 = vrot.lane.b32.xlu0 %v280, 111
        %v418 = vpop.permute.xlu0 %417
        %419 = vrot.lane.b32.xlu0 %v285, 111
        %v420 = vpop.permute.xlu0 %419
        %vm421 = vcmask 908288
        %v422 = vsel %vm421, %v416, %v418
        %v423 = vsel %vm421, %v418, %v420
        %v429 = vrot.slane %v341, 4
        %v430 = vrot.slane %v342, 4
        %v431 = vrot.slane %v343, 4
        %432 = vrot.lane.b32.xlu0 %v429, 110
        %v433 = vpop.permute.xlu0 %432
        %434 = vrot.lane.b32.xlu0 %v430, 110
        %v435 = vpop.permute.xlu0 %434
        %436 = vrot.lane.b32.xlu0 %v431, 110
        %v437 = vpop.permute.xlu0 %436
        %vm438 = vcmask 900096
        %v439 = vsel %vm438, %v433, %v435
        %v440 = vsel %vm438, %v435, %v437
        %446 = vrot.lane.b32.xlu0 %v353, 96
        %v447 = vpop.permute.xlu0 %446
        %448 = vrot.lane.b32.xlu0 %v354, 96
        %v449 = vpop.permute.xlu0 %448
        %450 = vrot.lane.b32.xlu0 %v355, 96
        %v451 = vpop.permute.xlu0 %450
        %vm452 = vcmask 785408
        %v453 = vsel %vm452, %v447, %v449
        %v454 = vsel %vm452, %v449, %v451
        %457 = vrot.lane.b32.xlu0 %v370, 95
        %v458 = vpop.permute.xlu0 %457
        %459 = vrot.lane.b32.xlu0 %v371, 95
        %v460 = vpop.permute.xlu0 %459
        %461 = vrot.lane.b32.xlu0 %v372, 95
        %v462 = vpop.permute.xlu0 %461
        %vm463 = vcmask 777216
        %v464 = vsel %vm463, %v458, %v460
        %v465 = vsel %vm463, %v460, %v462
        %471 = vrot.lane.b32.xlu0 %v365, 94
        %v472 = vpop.permute.xlu0 %471
        %473 = vrot.lane.b32.xlu0 %v366, 94
        %v474 = vpop.permute.xlu0 %473
        %475 = vrot.lane.b32.xlu0 %v367, 94
        %v476 = vpop.permute.xlu0 %475
        %vm477 = vcmask 769024
        %v478 = vsel %vm477, %v472, %v474
        %v479 = vsel %vm477, %v474, %v476
        %vm480 = vcmask 1043456
        %v481 = vsel %vm480, %v297, %v380
        %v482 = vsel %vm480, %v298, %v381
        %v483 = vsel %vm480, %v394, %v411
        %v484 = vsel %vm480, %v395, %v412
        %v485 = vsel %vm480, %v422, %v439
        %v486 = vsel %vm480, %v423, %v440
        %v487 = vsel %vm480, %v453, %v464
        %v488 = vsel %vm480, %v454, %v465
        %v489 = vld [vmem:[%s2] sm:$0xf]
        %v490 = vld [vmem:[%s1] sm:$0xf]
        %vm491 = vcmask 293888
        %v493 = vsel %vm491, %v490, 0
        %v495 = vsel %vm480, %v478, 0
        %v497 = vsel %vm480, %v479, 0
        %499 = vmatprep.subr.mxu0 %v482
        %500 = vmatpush1.msra.mxu0 %v481
        %501 = vmatprep.subr.mxu0 %v484
        %502 = vmatpush1.msra.mxu0 %v483
        %503 = vmatprep.subr.mxu0 %v486
        %504 = vmatpush1.msra.mxu0 %v485
        %505 = vmatprep.subr.mxu0 %v488
        %506 = vmatpush1.msra.mxu0 %v487
        %507 = vmatprep.subr.mxu0 %v497
        %508 = vmatpush1.msra.mxu0 %v495
        %509 = vmatprep.subr.mxu0 0.0
        %510 = vmatpush1.msra.mxu0 0.0
        %511 = vmatprep.subr.mxu0 0.0
        %512 = vmatpush1.msra.mxu0 0.0
        %513 = vmatprep.subr.mxu0 0.0
        %514 = vmatpush1.msra.mxu0 0.0
        %515 = vmatprep.subr.mxu0 0.0
        %516 = vmatpush1.msra.mxu0 0.0
        %517 = vmatprep.subr.mxu0 0.0
        %518 = vmatpush1.msra.mxu0 0.0
        %519 = vmatprep.subr.mxu0 0.0
        %520 = vmatpush1.msra.mxu0 0.0
        %521 = vmatprep.subr.mxu0 0.0
        %522 = vmatpush1.msra.mxu0 0.0
        %523 = vmatprep.subr.mxu0 0.0
        %524 = vmatpush1.msra.mxu0 0.0
        %525 = vmatprep.subr.mxu0 0.0
        %526 = vmatpush1.msra.mxu0 0.0
        %527 = vmatprep.subr.mxu0 0.0
        %528 = vmatpush1.msra.mxu0 0.0
        %529 = vmatprep.subr.mxu0 0.0
        %530 = vmatpush1.msra.mxu0 0.0
        %531 = vmatprep.subr.mxu0 0.0
        %532 = vmatpush1.msra.mxu0 0.0
        %533 = vmatprep.subr.mxu0 0.0
        %534 = vmatpush1.msra.mxu0 0.0
        %535 = vmatprep.subr.mxu0 0.0
        %536 = vmatpush1.msra.mxu0 0.0
        %537 = vmatprep.subr.mxu0 0.0
        %538 = vmatpush1.msra.mxu0 0.0
        %539 = vmatprep.subr.mxu0 0.0
        %540 = vmatpush1.msra.mxu0 0.0
        %541 = vmatprep.subr.mxu0 0.0
        %542 = vmatpush1.msra.mxu0 0.0
        %543 = vmatprep.subr.mxu0 0.0
        %544 = vmatpush1.msra.mxu0 0.0
        %545 = vmatprep.subr.mxu0 0.0
        %546 = vmatpush1.msra.mxu0 0.0
        %547 = vmatprep.subr.mxu0 0.0
        %548 = vmatpush1.msra.mxu0 0.0
        %549 = vmatprep.subr.mxu0 0.0
        %550 = vmatpush1.msra.mxu0 0.0
        %551 = vmatprep.subr.mxu0 0.0
        %552 = vmatpush1.msra.mxu0 0.0
        %553 = vmatprep.subr.mxu0 0.0
        %554 = vmatpush1.msra.mxu0 0.0
        %555 = vmatprep.subr.mxu0 0.0
        %556 = vmatpush1.msra.mxu0 0.0
        %557 = vmatprep.subr.mxu0 0.0
        %558 = vmatpush1.msra.mxu0 0.0
        %559 = vmatprep.subr.mxu0 0.0
        %560 = vmatpush1.msra.mxu0 0.0
        %561 = vmatprep.subr.mxu0 0.0
        %562 = vmatpush1.msra.mxu0 0.0
        %563 = vmatprep.mubr.f32.mxu0 0.0
        %564 = vmatmul.mubr.f32.gmra.mrb[0].mxu0 %v493
        %v565 = vpop.f32.mrb[0].mxu0
        %v566 = vadd.f32 0.0, %v565
        %v567 = vpop.f32.mrb[0].mxu0
        %v568 = vadd.f32 0.0, %v567
        %569 = vdwg.mxu0
        %571 = vset.pattern.permute.xlu0 0
        %572 = vperm.xlu0 %571, %v489
        %v573 = vpop.permute.xlu0 %572
        %v575 = vadd.f32 %v573, %v566
        %v576 = vadd.f32 %v573, %v568
        %v577 = vmax.f32 %v575, 0.0
        %v578 = vmax.f32 %v576, 0.0
        %581 = vrot.lane.b32.xlu0 %v577, 17
        %v582 = vpop.permute.xlu0 %581
        %583 = vrot.lane.b32.xlu0 %v578, 17
        %v584 = vpop.permute.xlu0 %583
        %v585 = vsel %vm279, %v582, %v584
        %v589 = vsel %vm279, 0.0, %v582
        %v590 = vsel %vm279, %v584, 0.0
        %v591 = vmul.f32 %v589, %v290
        %v592 = vmul.f32 %v585, %v294
        %v593 = vmul.f32 %v589, %v309
        %v594 = vmul.f32 %v585, %v313
        %v595 = vmul.f32 %v590, %v311
        %v596 = vmul.f32 %v589, %v321
        %v597 = vmul.f32 %v585, %v325
        %v598 = vmul.f32 %v590, %v323
        %v599 = vmul.f32 %v589, %v333
        %v600 = vmul.f32 %v585, %v337
        %v601 = vmul.f32 %v590, %v335
        %v602 = vmul.f32 %v589, %v345
        %v603 = vmul.f32 %v585, %v349
        %v604 = vmul.f32 %v590, %v347
        %v605 = vmul.f32 %v589, %v357
        %v606 = vmul.f32 %v585, %v361
        %v607 = vmul.f32 %v590, %v359
        %v610 = vrot.slane %v589, 4
        %v611 = vrot.slane %v585, 4
        %v612 = vrot.slane %v590, 4
        %613 = vrot.lane.b32.xlu0 %v610, 127
        %v614 = vpop.permute.xlu0 %613
        %615 = vrot.lane.b32.xlu0 %v611, 127
        %v616 = vpop.permute.xlu0 %615
        %617 = vrot.lane.b32.xlu0 %v612, 127
        %v618 = vpop.permute.xlu0 %617
        %v619 = vsel %vm379, %v614, %v616
        %v620 = vsel %vm379, %v616, %v618
        %626 = vrot.lane.b32.xlu0 %v593, 126
        %v627 = vpop.permute.xlu0 %626
        %628 = vrot.lane.b32.xlu0 %v594, 126
        %v629 = vpop.permute.xlu0 %628
        %630 = vrot.lane.b32.xlu0 %v595, 126
        %v631 = vpop.permute.xlu0 %630
        %v632 = vsel %vm393, %v627, %v629
        %v633 = vsel %vm393, %v629, %v631
        %v639 = vrot.slane %v596, 4
        %v640 = vrot.slane %v597, 4
        %v641 = vrot.slane %v598, 4
        %642 = vrot.lane.b32.xlu0 %v639, 112
        %v643 = vpop.permute.xlu0 %642
        %644 = vrot.lane.b32.xlu0 %v640, 112
        %v645 = vpop.permute.xlu0 %644
        %646 = vrot.lane.b32.xlu0 %v641, 112
        %v647 = vpop.permute.xlu0 %646
        %v648 = vsel %vm410, %v643, %v645
        %v649 = vsel %vm410, %v645, %v647
        %652 = vrot.lane.b32.xlu0 %v589, 111
        %v653 = vpop.permute.xlu0 %652
        %654 = vrot.lane.b32.xlu0 %v585, 111
        %v655 = vpop.permute.xlu0 %654
        %656 = vrot.lane.b32.xlu0 %v590, 111
        %v657 = vpop.permute.xlu0 %656
        %v658 = vsel %vm421, %v653, %v655
        %v659 = vsel %vm421, %v655, %v657
        %v665 = vrot.slane %v599, 4
        %v666 = vrot.slane %v600, 4
        %v667 = vrot.slane %v601, 4
        %668 = vrot.lane.b32.xlu0 %v665, 110
        %v669 = vpop.permute.xlu0 %668
        %670 = vrot.lane.b32.xlu0 %v666, 110
        %v671 = vpop.permute.xlu0 %670
        %672 = vrot.lane.b32.xlu0 %v667, 110
        %v673 = vpop.permute.xlu0 %672
        %v674 = vsel %vm438, %v669, %v671
        %v675 = vsel %vm438, %v671, %v673
        %681 = vrot.lane.b32.xlu0 %v602, 96
        %v682 = vpop.permute.xlu0 %681
        %683 = vrot.lane.b32.xlu0 %v603, 96
        %v684 = vpop.permute.xlu0 %683
        %685 = vrot.lane.b32.xlu0 %v604, 96
        %v686 = vpop.permute.xlu0 %685
        %v687 = vsel %vm452, %v682, %v684
        %v688 = vsel %vm452, %v684, %v686
        %691 = vrot.lane.b32.xlu0 %v610, 95
        %v692 = vpop.permute.xlu0 %691
        %693 = vrot.lane.b32.xlu0 %v611, 95
        %v694 = vpop.permute.xlu0 %693
        %695 = vrot.lane.b32.xlu0 %v612, 95
        %v696 = vpop.permute.xlu0 %695
        %v697 = vsel %vm463, %v692, %v694
        %v698 = vsel %vm463, %v694, %v696
        %704 = vrot.lane.b32.xlu0 %v605, 94
        %v705 = vpop.permute.xlu0 %704
        %706 = vrot.lane.b32.xlu0 %v606, 94
        %v707 = vpop.permute.xlu0 %706
        %708 = vrot.lane.b32.xlu0 %v607, 94
        %v709 = vpop.permute.xlu0 %708
        %v710 = vsel %vm477, %v705, %v707
        %v711 = vsel %vm477, %v707, %v709
        %v712 = vsel %vm480, %v591, %v619
        %v713 = vsel %vm480, %v592, %v620
        %v714 = vsel %vm480, %v632, %v648
        %v715 = vsel %vm480, %v633, %v649
        %v716 = vsel %vm480, %v658, %v674
        %v717 = vsel %vm480, %v659, %v675
        %v718 = vsel %vm480, %v687, %v697
        %v719 = vsel %vm480, %v688, %v698
        %v720 = vld [vmem:[%s4] sm:$0xf]
        %v721 = vld [vmem:[%s3] sm:$0xf]
        %v723 = vsel %vm491, %v721, 0
        %v725 = vsel %vm480, %v710, 0
        %v727 = vsel %vm480, %v711, 0
        %729 = vmatprep.subr.mxu0 %v713
        %730 = vmatpush1.msra.mxu0 %v712
        %731 = vmatprep.subr.mxu0 %v715
        %732 = vmatpush1.msra.mxu0 %v714
        %733 = vmatprep.subr.mxu0 %v717
        %734 = vmatpush1.msra.mxu0 %v716
        %735 = vmatprep.subr.mxu0 %v719
        %736 = vmatpush1.msra.mxu0 %v718
        %737 = vmatprep.subr.mxu0 %v727
        %738 = vmatpush1.msra.mxu0 %v725
        %739 = vmatprep.subr.mxu0 0.0
        %740 = vmatpush1.msra.mxu0 0.0
        %741 = vmatprep.subr.mxu0 0.0
        %742 = vmatpush1.msra.mxu0 0.0
        %743 = vmatprep.subr.mxu0 0.0
        %744 = vmatpush1.msra.mxu0 0.0
        %745 = vmatprep.subr.mxu0 0.0
        %746 = vmatpush1.msra.mxu0 0.0
        %747 = vmatprep.subr.mxu0 0.0
        %748 = vmatpush1.msra.mxu0 0.0
        %749 = vmatprep.subr.mxu0 0.0
        %750 = vmatpush1.msra.mxu0 0.0
        %751 = vmatprep.subr.mxu0 0.0
        %752 = vmatpush1.msra.mxu0 0.0
        %753 = vmatprep.subr.mxu0 0.0
        %754 = vmatpush1.msra.mxu0 0.0
        %755 = vmatprep.subr.mxu0 0.0
        %756 = vmatpush1.msra.mxu0 0.0
        %757 = vmatprep.subr.mxu0 0.0
        %758 = vmatpush1.msra.mxu0 0.0
        %759 = vmatprep.subr.mxu0 0.0
        %760 = vmatpush1.msra.mxu0 0.0
        %761 = vmatprep.subr.mxu0 0.0
        %762 = vmatpush1.msra.mxu0 0.0
        %763 = vmatprep.subr.mxu0 0.0
        %764 = vmatpush1.msra.mxu0 0.0
        %765 = vmatprep.subr.mxu0 0.0
        %766 = vmatpush1.msra.mxu0 0.0
        %767 = vmatprep.subr.mxu0 0.0
        %768 = vmatpush1.msra.mxu0 0.0
        %769 = vmatprep.subr.mxu0 0.0
        %770 = vmatpush1.msra.mxu0 0.0
        %771 = vmatprep.subr.mxu0 0.0
        %772 = vmatpush1.msra.mxu0 0.0
        %773 = vmatprep.subr.mxu0 0.0
        %774 = vmatpush1.msra.mxu0 0.0
        %775 = vmatprep.subr.mxu0 0.0
        %776 = vmatpush1.msra.mxu0 0.0
        %777 = vmatprep.subr.mxu0 0.0
        %778 = vmatpush1.msra.mxu0 0.0
        %779 = vmatprep.subr.mxu0 0.0
        %780 = vmatpush1.msra.mxu0 0.0
        %781 = vmatprep.subr.mxu0 0.0
        %782 = vmatpush1.msra.mxu0 0.0
        %783 = vmatprep.subr.mxu0 0.0
        %784 = vmatpush1.msra.mxu0 0.0
        %785 = vmatprep.subr.mxu0 0.0
        %786 = vmatpush1.msra.mxu0 0.0
        %787 = vmatprep.subr.mxu0 0.0
        %788 = vmatpush1.msra.mxu0 0.0
        %789 = vmatprep.subr.mxu0 0.0
        %790 = vmatpush1.msra.mxu0 0.0
        %791 = vmatprep.subr.mxu0 0.0
        %792 = vmatpush1.msra.mxu0 0.0
        %793 = vmatprep.mubr.f32.mxu0 0.0
        %794 = vmatmul.mubr.f32.gmra.mrb[0].mxu0 %v723
        %v795 = vpop.f32.mrb[0].mxu0
        %v796 = vadd.f32 0.0, %v795
        %v797 = vpop.f32.mrb[0].mxu0
        %v798 = vadd.f32 0.0, %v797
        %799 = vdwg.mxu0
        %801 = vset.pattern.permute.xlu0 0
        %802 = vperm.xlu0 %801, %v720
        %v803 = vpop.permute.xlu0 %802
        %v805 = vadd.f32 %v803, %v796
        %v806 = vadd.f32 %v803, %v798
        %v809 = vcombine.low %v805, %v806
        %v811 = vadd.f32 %v268, %v809
        %812 = vst [vmem:[%s267] sm:$0xff] %v811
        %s813 = sand.u32 %s162, 1
        %s814 = scalar_lea.sflag [#allocation4], %s813
        %s815 = sand.u32 %s162, 1
        %s816 = smul.addr %s815, 8
        %s817 = scalar_lea.vmem [#allocation5], %s816
        // Predicated region
        $region49: #{tpu_custom_call.1} parent=43 // pred_check
          %p818 = pneg %p172
        $region50: #{tpu_custom_call.1} parent=43 // pred_check_branch
          %820 = sbr.rel (%p818) target = $region52
        $region51: #{tpu_custom_call.1} parent=43 // pred_region
          %s822 = ssub.s32 128, 128
          %823 = vsyncadd %s814, %s822
          %s824 = smul.addr %s23, 2
          %s825 = smul.addr %s824, 64
          %s826 = scalar_lea.hbm %s6, %s825
          %s828 = sshll.u32 %s817, 4
          %s829 = int_to_ptr.vmem [resolvable:$true] %s828
          %831 = dma.vmem_to_hbm [thread:$0]  %s829, 128, %s826, %s814
        $region52: #{tpu_custom_call.1} parent=43 // pred_fallthru
          _
      $region44: #{tpu_custom_call.1} parent=5 // pred_fallthru
        _
      %p832 = scmp.le.s32.totalorder 2, %s18
      // Predicated region
      $region53: #{tpu_custom_call.1} parent=5 // pred_check
        %p833 = pneg %p832
      $region54: #{tpu_custom_call.1} parent=5 // pred_check_branch
        %835 = sbr.rel (%p833) target = $region56
      $region55: #{tpu_custom_call.1} parent=5 // pred_region
        %s836 = ssub.s32 %s18, 2
        // Predicated region
        $region57: #{tpu_custom_call.1} parent=55 // pred_check
          %p837 = pneg %p178
        $region58: #{tpu_custom_call.1} parent=55 // pred_check_branch
          %839 = sbr.rel (%p837) target = $region60
        $region59: #{tpu_custom_call.1} parent=55 // pred_region
          %s840 = sand.u32 %s163, 1
          %s841 = scalar_lea.sflag [#allocation4], %s840
          %s842 = sand.u32 %s163, 1
          %s843 = smul.addr %s842, 8
          %s844 = scalar_lea.vmem [#allocation5], %s843
          %845 = dma.done %s841, 128
        $region60: #{tpu_custom_call.1} parent=55 // pred_fallthru
          _
      $region56: #{tpu_custom_call.1} parent=5 // pred_fallthru
        _
    $region6: #{tpu_custom_call.1} parent=1 // loop_footer
      %s22 = sadd.s32 1, %s18
    $region7: #{tpu_custom_call.1} parent=1 // loop_footer_branch
      %17 = sbr.rel target = $region3
    $region8: #{tpu_custom_call.1} parent=1 // loop_exit
      _
    %846 = vsyncpa [#allocation3], 1
    %s847 = scalar_lea.sflag [#allocation3], 1
    %848 = vsyncpa %s847, 1
    %849 = vsyncpa [#allocation4], 1
    %s850 = scalar_lea.sflag [#allocation4], 1
    %851 = vsyncpa %s850, 1

</llo_original>
